<compile_context>
chip_gen: v5e
topology: v5e:2x2
jax: 0.10.0
libtpu: 0.0.40
codegen_flags: <defaults>
</compile_context>

<pallas_src>
import jax
import jax.numpy as jnp
from jax import lax
from jax.experimental import pallas as pl
from jax.experimental.pallas import tpu as pltpu

LANE = 128
SUBLANE = 8
CHUNK = SUBLANE * LANE            # 1024-element alignment unit for the main stream
MAX_BLOCK_ROWS = 8192             # (8192, 128) f32 tile = 4 MiB per input per buffer
VMEM_LIMIT_BYTES = 32 * 1024 * 1024
THRESHOLD = 0.01

_MULTI_TC = None


def _multi_tensorcore_chip():
    """True on chips whose TensorCores share one Pallas kernel (megacore-style)."""
    global _MULTI_TC
    if _MULTI_TC is None:
        try:
            kind = jax.devices()[0].device_kind.lower()
        except Exception:
            kind = ""
        _MULTI_TC = any(tag in kind for tag in ("v4", "v5p", "7"))
    return _MULTI_TC


# ----------------------------- Pallas kernel -------------------------------
def _make_kernel(block_rows, n_valid_rows, need_mask):
    """Match-count kernel for a given static configuration.

    block_rows:   rows per tile (multiple of 8).
    n_valid_rows: number of real rows in the streamed (rows, 128) array.
    need_mask:    whether any partial / ghost block exists.
    """
    sub_blocks = block_rows // SUBLANE

    def fold(match_i32):
        # Sublane fold of a (block_rows, LANE) tile into an (8, LANE) slab:
        # pure VPU vreg+vreg adds, no per-step XLU cross-lane reduce.
        return match_i32.reshape(sub_blocks, SUBLANE, LANE).sum(axis=0)[None, :, :]

    def kernel(pred_ref, y_ref, acc_ref):
        c = pl.program_id(0)              # 'parallel' core axis
        i = pl.program_id(1)              # sequential reduction axis

        @pl.when(i == 0)
        def _init():
            acc_ref[...] = jnp.zeros_like(acc_ref)

        # Binarize in f32 (bytes already moved at native width; 0.01 is not
        # representable in bf16, so the compare stays f32 on all chips).
        pb = pred_ref[...].astype(jnp.float32) > THRESHOLD
        yb = y_ref[...].astype(jnp.float32) > THRESHOLD
        m = (pb == yb).astype(jnp.int32)                     # (block_rows, LANE)

        if not need_mask:
            acc_ref[...] += fold(m)
        else:
            blk = c * pl.num_programs(1) + i                 # logical block id
            fully_valid = (blk + 1) * block_rows <= n_valid_rows

            @pl.when(fully_valid)
            def _fast():                                     # interior: pure stream
                acc_ref[...] += fold(m)

            @pl.when(jnp.logical_not(fully_valid))
            def _masked():                                   # edge / ghost blocks only
                row = lax.broadcasted_iota(jnp.int32, (block_rows, LANE), 0)
                grow = blk * block_rows + row                # global row index
                acc_ref[...] += fold(jnp.where(grow < n_valid_rows, m, 0))

    return kernel


def _count_matches_aligned(pred2, y2, max_block_rows, forced_ncores=None):
    """int32 count of matching binarizations over (n_rows, 128) aligned arrays."""
    n_rows = pred2.shape[0]                            # multiple of 8

    block_rows = min(int(max_block_rows), n_rows)
    block_rows = max(SUBLANE, (block_rows // SUBLANE) * SUBLANE)
    n_blocks = pl.cdiv(n_rows, block_rows)

    if forced_ncores is not None:
        ncores = max(1, min(int(forced_ncores), n_blocks))
    elif n_blocks >= 2 and (n_blocks % 2 == 0 or _multi_tensorcore_chip()):
        ncores = 2          # even split is free everywhere; odd split only if 2 TCs
    else:
        ncores = 1          # single-TC chip / single block: no ghost re-read

    nb_per_core = pl.cdiv(n_blocks, ncores)
    covered_rows = ncores * nb_per_core * block_rows
    need_mask = covered_rows != n_rows

    if ncores * nb_per_core == n_blocks:
        def in_map(c, i):
            return (c * nb_per_core + i, 0)
    else:
        # Ghost programs re-read the last real block; their contribution is
        # masked to zero inside the kernel.
        def in_map(c, i):
            return (jnp.minimum(c * nb_per_core + i, n_blocks - 1), 0)

    kernel = _make_kernel(block_rows, n_rows, need_mask)

    partials = pl.pallas_call(
        kernel,
        out_shape=jax.ShapeDtypeStruct((ncores, SUBLANE, LANE), jnp.int32),
        grid_spec=pltpu.PrefetchScalarGridSpec(
            num_scalar_prefetch=0,
            grid=(ncores, nb_per_core),
            # TODO(synk): if a trace shows an exposed DMA gap between steps,
            # try pipeline_mode=pl.Buffered(3) on these two in_specs.
            in_specs=[
                pl.BlockSpec((block_rows, LANE), in_map),
                pl.BlockSpec((block_rows, LANE), in_map),
            ],
            out_specs=pl.BlockSpec((1, SUBLANE, LANE), lambda c, i: (c, 0, 0)),
        ),
        compiler_params=pltpu.CompilerParams(
            dimension_semantics=("parallel", "arbitrary"),
            vmem_limit_bytes=VMEM_LIMIT_BYTES,
        ),
    )(pred2, y2)

    # One cross-lane reduce for the whole kernel; int32 is exact up to 2^31.
    return jnp.sum(partials)


def _count_matches_flat_jnp(pred_flat, y_flat):
    pb = pred_flat.astype(jnp.float32) > THRESHOLD
    yb = y_flat.astype(jnp.float32) > THRESHOLD
    return jnp.sum((pb == yb).astype(jnp.int32))


def _count_matches(pred_flat, y_flat, max_block_rows=MAX_BLOCK_ROWS, _ncores=None):
    """int32 count of positions where binarize(pred) == binarize(y)."""
    n_valid = pred_flat.shape[0]
    n_aligned = (n_valid // CHUNK) * CHUNK
    tail = n_valid - n_aligned                        # < 1024 elements

    if tail:
        tail_count = _count_matches_flat_jnp(
            lax.slice(pred_flat, (n_aligned,), (n_valid,)),
            lax.slice(y_flat, (n_aligned,), (n_valid,)))
    else:
        tail_count = jnp.int32(0)

    if n_aligned == 0:                                # smaller than one (8,128) tile
        return tail_count

    if tail:
        pred_main = lax.slice(pred_flat, (0,), (n_aligned,))
        y_main = lax.slice(y_flat, (0,), (n_aligned,))
    else:                                             # common case: no copy at all
        pred_main = pred_flat
        y_main = y_flat

    n_rows = n_aligned // LANE                        # multiple of 8
    main_count = _count_matches_aligned(
        pred_main.reshape(n_rows, LANE), y_main.reshape(n_rows, LANE),
        max_block_rows, forced_ncores=_ncores)
    return main_count + tail_count


# ------------------------------ Python wrapper ------------------------------
def binary_match(pred, y, op_type="raw",
                 _max_block_rows=MAX_BLOCK_ROWS, _ncores=None):
    """JAX/Pallas equivalent of BinaryMatch(op_type).forward(pred, y).

    pred, y: (b, l, c, h, w) arrays (any float/int dtype).
    Returns the fraction of positions whose binarization (x > 0.01) agrees.
    """
    assert op_type in ("raw", "sum_c", "sum_cp")

    pred = jnp.asarray(pred)
    y = jnp.asarray(y)

    if op_type == "sum_c":
        # rearrange 'b l (p c) h w -> b l c p h w', p=2, then sum over c.
        b, l, pc, h, w = pred.shape
        c = pc // 2
        pred = pred.reshape(b, l, 2, c, h, w).sum(axis=3)    # (b, l, 2, h, w)
        y = y.reshape(b, l, 2, c, h, w).sum(axis=3)
    elif op_type == "sum_cp":
        pred = pred.sum(axis=2)                              # (b, l, h, w)
        y = y.sum(axis=2)
    # TODO(synk): fuse the sum_c / sum_cp channel reduction into the Pallas
    # kernel (3-D block over (b*l*p, c, h*w), sum over c in VMEM before
    # thresholding) to avoid materializing the reduced copy in HBM.

    n_valid = pred.size
    matched = _count_matches(pred.reshape(-1), y.reshape(-1),
                             max_block_rows=_max_block_rows, _ncores=_ncores)
    # PyTorch returns .double(); the count here is an exact int32 and the
    # division happens in float32 (closest available with x64 disabled).
    return matched.astype(jnp.float32) / jnp.float32(n_valid)


# ------------------------------ pure-JAX reference ---------------------------
def binary_match_ref(pred, y, op_type="raw"):
    pred = jnp.asarray(pred, jnp.float32)
    y = jnp.asarray(y, jnp.float32)
    if op_type == "sum_c":
        b, l, pc, h, w = pred.shape
        c = pc // 2
        pred = pred.reshape(b, l, 2, c, h, w).sum(axis=3)
        y = y.reshape(b, l, 2, c, h, w).sum(axis=3)
    elif op_type == "sum_cp":
        pred = pred.sum(axis=2)
        y = y.sum(axis=2)
    pb = pred > THRESHOLD
    yb = y > THRESHOLD
    return jnp.mean((pb == yb).astype(jnp.float32))


if __name__ == "__main__":
    key = jax.random.PRNGKey(0)
    k1, k2, k3, k4, k5, k6 = jax.random.split(key, 6)

    # Small event-voxel shape: batch=2, seq=2, channels=4, spatial 16x16.
    shape1 = (2, 2, 4, 16, 16)
    pred1 = jax.random.uniform(k1, shape1, jnp.float32) - 0.3   # mix of <= / > thr
    y1 = jax.random.uniform(k2, shape1, jnp.float32) - 0.3

    # Ragged shape (size not a multiple of 1024) -> jnp tail path.
    shape2 = (2, 3, 5, 20, 24)
    pred2 = jax.random.uniform(k3, shape2, jnp.float32) - 0.3
    y2 = jax.random.uniform(k4, shape2, jnp.float32) - 0.3

    # Tiny shape smaller than one (8,128) tile -> pure-jnp path (no kernel).
    shape3 = (1, 1, 1, 5, 7)
    pred3 = jax.random.uniform(k5, shape3, jnp.float32) - 0.3
    y3 = jax.random.uniform(k6, shape3, jnp.float32) - 0.3

    cases = [
        # (pred, y, op_type, max_block_rows, forced ncores)
        (pred1, y1, "raw", MAX_BLOCK_ROWS, None),
        (pred1, y1, "sum_c", MAX_BLOCK_ROWS, None),
        (pred1, y1, "sum_cp", MAX_BLOCK_ROWS, None),
        (pred1, y1, "raw", 8, 2),                  # multi-block, even 2-way split
        (pred2, y2, "raw", MAX_BLOCK_ROWS, None),  # ragged size -> jnp tail
        (pred2, y2, "raw", 8, None),               # many blocks, heuristic cores
        (pred2, y2, "raw", 40, 2),                 # odd blocks -> ghost + edge mask
        (pred3, y3, "raw", MAX_BLOCK_ROWS, None),  # smaller than one tile
    ]
    for p, t, op_type, mbr, nc in cases:
        out = jax.block_until_ready(
            binary_match(p, t, op_type=op_type, _max_block_rows=mbr, _ncores=nc))
        ref = binary_match_ref(p, t, op_type=op_type)
        assert abs(float(out) - float(ref)) < 1e-6, (
            op_type, mbr, nc, float(out), float(ref))

    print("KERNEL_OK")
</pallas_src>

<mosaic_0001>
module attributes {stable_mosaic.version = 11 : i64} {
  func.func @kernel(%arg0: i32, %arg1: i32, %arg2: memref<32x128xf32, #tpu.memory_space<vmem>>, %arg3: memref<32x128xf32, #tpu.memory_space<vmem>>, %arg4: memref<1x8x128xi32, #tpu.memory_space<vmem>>) attributes {dimension_semantics = [#tpu.dimension_semantics<parallel>, #tpu.dimension_semantics<arbitrary>], iteration_bounds = array<i64: 1, 1>, scalar_prefetch = 0 : i64, scratch_operands = 0 : i64, tpu.core_type = #tpu.core_type<tc>, window_params = [{transform_indices = @transform_0, window_bounds = array<i64: 32, 128>}, {transform_indices = @transform_1, window_bounds = array<i64: 32, 128>}, {transform_indices = @transform_2, window_bounds = array<i64: 1, 8, 128>}]} {
    %c0_i32 = arith.constant 0 : i32
    %0 = arith.cmpi eq, %arg1, %c0_i32 : i32
    %1 = arith.extui %0 : i1 to i32
    %c0_i32_0 = arith.constant 0 : i32
    %2 = arith.cmpi ne, %1, %c0_i32_0 : i32
    scf.if %2 {
      %c0_i32_13 = arith.constant 0 : i32
      %18 = vector.broadcast %c0_i32_13 : i32 to vector<1x8x128xi32>
      %c0_14 = arith.constant 0 : index
      %c0_15 = arith.constant 0 : index
      %c0_16 = arith.constant 0 : index
      %19 = vector.load %arg4[%c0_14, %c0_15, %c0_16] : memref<1x8x128xi32, #tpu.memory_space<vmem>>, vector<1x8x128xi32>
      tpu.vector_store %arg4[%c0_14, %c0_15, %c0_16], %18 {strides = array<i32>} : memref<1x8x128xi32, #tpu.memory_space<vmem>>, vector<1x8x128xi32>,
    } else {
    }
    %c0 = arith.constant 0 : index
    %c0_1 = arith.constant 0 : index
    %3 = vector.load %arg2[%c0, %c0_1] : memref<32x128xf32, #tpu.memory_space<vmem>>, vector<32x128xf32>
    %cst = arith.constant 0.00999999977 : f32
    %4 = vector.broadcast %cst : f32 to vector<32x128xf32>
    %5 = arith.cmpf ogt, %3, %4 : vector<32x128xf32>
    %c0_2 = arith.constant 0 : index
    %c0_3 = arith.constant 0 : index
    %6 = vector.load %arg3[%c0_2, %c0_3] : memref<32x128xf32, #tpu.memory_space<vmem>>, vector<32x128xf32>
    %cst_4 = arith.constant 0.00999999977 : f32
    %7 = vector.broadcast %cst_4 : f32 to vector<32x128xf32>
    %8 = arith.cmpf ogt, %6, %7 : vector<32x128xf32>
    %9 = arith.xori %5, %8 : vector<32x128xi1>
    %cst_5 = arith.constant dense<true> : vector<32x128xi1>
    %10 = arith.xori %9, %cst_5 : vector<32x128xi1>
    %11 = arith.extui %10 : vector<32x128xi1> to vector<32x128xi32>
    %c0_6 = arith.constant 0 : index
    %c0_7 = arith.constant 0 : index
    %c0_8 = arith.constant 0 : index
    %12 = vector.load %arg4[%c0_6, %c0_7, %c0_8] : memref<1x8x128xi32, #tpu.memory_space<vmem>>, vector<1x8x128xi32>
    %13 = vector.shape_cast %11 : vector<32x128xi32> to vector<4x8x128xi32>
    %cst_9 = arith.constant dense<0> : vector<8x128xi32>
    %14 = vector.multi_reduction <add>, %13, %cst_9 [0] : vector<4x8x128xi32> to vector<8x128xi32>
    %15 = vector.shape_cast %14 : vector<8x128xi32> to vector<1x8x128xi32>
    %16 = arith.addi %12, %15 : vector<1x8x128xi32>
    %c0_10 = arith.constant 0 : index
    %c0_11 = arith.constant 0 : index
    %c0_12 = arith.constant 0 : index
    %17 = vector.load %arg4[%c0_10, %c0_11, %c0_12] : memref<1x8x128xi32, #tpu.memory_space<vmem>>, vector<1x8x128xi32>
    tpu.vector_store %arg4[%c0_10, %c0_11, %c0_12], %16 {strides = array<i32>} : memref<1x8x128xi32, #tpu.memory_space<vmem>>, vector<1x8x128xi32>,
    return
  }
  func.func @transform_0(%arg0: i32, %arg1: i32) -> (i32, i32) {
    %c1_i32 = arith.constant 1 : i32
    %0 = arith.muli %arg0, %c1_i32 : i32
    %1 = arith.addi %0, %arg1 : i32
    %c0_i32 = arith.constant 0 : i32
    %c0_i32_0 = arith.constant 0 : i32
    return %1, %c0_i32 : i32, i32
  }
  func.func @transform_1(%arg0: i32, %arg1: i32) -> (i32, i32) {
    %c1_i32 = arith.constant 1 : i32
    %0 = arith.muli %arg0, %c1_i32 : i32
    %1 = arith.addi %0, %arg1 : i32
    %c0_i32 = arith.constant 0 : i32
    %c0_i32_0 = arith.constant 0 : i32
    return %1, %c0_i32 : i32, i32
  }
  func.func @transform_2(%arg0: i32, %arg1: i32) -> (i32, i32, i32) {
    %c0_i32 = arith.constant 0 : i32
    %c0_i32_0 = arith.constant 0 : i32
    %c0_i32_1 = arith.constant 0 : i32
    return %arg0, %c0_i32, %c0_i32_0 : i32, i32, i32
  }
}

</mosaic_0001>

<llo_original>
// kernel: tpu_custom_call.1
$region0: #{tpu_custom_call.1}
  #allocation0 [shape = 'u32[]', space=smem, size = 0x4, offset = 0x4, fixed_abs, tag = 'smem constant byte address 0x4 - core index']
  #allocation1 [shape = 'u32[72,128]{1,0:T(1,128)}', space=vmem, size = 0x9000, scoped, tag = 'internal scratch']
  %s0 = inlined_call_operand.hbm [shape: f32[32,128], index: 0, kind: input, shape index: {}]
  %s1 = inlined_call_operand.hbm [shape: f32[32,128], index: 1, kind: input, shape index: {}]
  %s2 = inlined_call_operand.hbm [shape: s32[1,8,128], index: 2, kind: output, shape index: {}]
  %s3 = sld [smem:[#allocation0]]
  $region30: #{tpu_custom_call.1} parent=0
    _
  %s5 = ssub.s32 1, %s3
  %s6 = scalar_select 0, %s5, %s3
  $region1: #{tpu_custom_call.1} parent=0
    #allocation2 [shape = 'u8[16384]{0}', space=vmem, size = 0x4000, scoped, tag = 'input window, operand 0, single buffered']
    #allocation3 [shape = 's32[1]{0}', space=sflag, size = 0x4, scoped, tag = 'scoped memory for tpu_custom_call.1']
    #allocation4 [shape = 's32[1]{0}', space=sflag, size = 0x4, scoped, tag = 'scoped memory for tpu_custom_call.1']
    #allocation5 [shape = 'u8[16384]{0}', space=vmem, size = 0x4000, scoped, tag = 'input window, operand 1, single buffered']
    #allocation6 [shape = 's32[1]{0}', space=sflag, size = 0x4, scoped, tag = 'scoped memory for tpu_custom_call.1']
    #allocation7 [shape = 'u8[4096]{0}', space=vmem, size = 0x1000, scoped, tag = 'output window, operand 0, single buffered']
    %7 = vsyncpa [#allocation3], 0
    %8 = vsyncpa [#allocation6], 0
    %9 = vsyncpa [#allocation4], 0
    // Predicated region
    $region2: #{tpu_custom_call.1} parent=1 // pred_check
      _
    $region3: #{tpu_custom_call.1} parent=1 // pred_check_branch
      %11 = sbr.rel (0) target = $region5
    $region4: #{tpu_custom_call.1} parent=1 // pred_region
      %s12 = sadd.s32 0, 0
      %s13 = smul.u32 4, %s12
      %15 = vsyncadd [#allocation3], 0
      %s16 = smul.addr %s13, 8
      %s17 = scalar_lea.hbm %s0, %s16
      %s18 = sshll.u32 %s17, 4
      %s19 = int_to_ptr.hbm [resolvable:$true] %s18
      %s20 = sshll.u32 [#allocation2], 4
      %s21 = int_to_ptr.vmem [resolvable:$true] %s20
      %26 = dma.hbm_to_vmem [thread:$0]  %s19, 512, %s21, [#allocation3], 128, 128, 8
    $region5: #{tpu_custom_call.1} parent=1 // pred_fallthru
      _
    // Predicated region
    $region6: #{tpu_custom_call.1} parent=1 // pred_check
      _
    $region7: #{tpu_custom_call.1} parent=1 // pred_check_branch
      %28 = sbr.rel (0) target = $region9
    $region8: #{tpu_custom_call.1} parent=1 // pred_region
      %s29 = sadd.s32 0, 0
      %s30 = smul.u32 4, %s29
      %32 = vsyncadd [#allocation6], 0
      %s33 = smul.addr %s30, 8
      %s34 = scalar_lea.hbm %s1, %s33
      %s35 = sshll.u32 %s34, 4
      %s36 = int_to_ptr.hbm [resolvable:$true] %s35
      %s37 = sshll.u32 [#allocation5], 4
      %s38 = int_to_ptr.vmem [resolvable:$true] %s37
      %43 = dma.hbm_to_vmem [thread:$0]  %s36, 512, %s38, [#allocation6], 128, 128, 8
    $region9: #{tpu_custom_call.1} parent=1 // pred_fallthru
      _
    // Predicated region
    $region10: #{tpu_custom_call.1} parent=1 // pred_check
      _
    $region11: #{tpu_custom_call.1} parent=1 // pred_check_branch
      %45 = sbr.rel (0) target = $region13
    $region12: #{tpu_custom_call.1} parent=1 // pred_region
      %47 = dma.done [#allocation3], 512
    $region13: #{tpu_custom_call.1} parent=1 // pred_fallthru
      _
    // Predicated region
    $region14: #{tpu_custom_call.1} parent=1 // pred_check
      _
    $region15: #{tpu_custom_call.1} parent=1 // pred_check_branch
      %49 = sbr.rel (0) target = $region17
    $region16: #{tpu_custom_call.1} parent=1 // pred_region
      %51 = dma.done [#allocation6], 512
    $region17: #{tpu_custom_call.1} parent=1 // pred_fallthru
      _
    %s52 = sadd.s32 0, 0
    %s53 = smul.u32 4, %s52
    %s54 = sadd.s32 0, 0
    %s55 = smul.u32 4, %s54
    %p56 = scmp.eq.s32.totalorder 0, 0
    // Predicated region
    $region18: #{tpu_custom_call.1} parent=1 // pred_check
      %p57 = pneg %p56
    $region19: #{tpu_custom_call.1} parent=1 // pred_check_branch
      %59 = sbr.rel (%p57) target = $region21
    $region20: #{tpu_custom_call.1} parent=1 // pred_region
      %60 = vst [vmem:[#allocation7] sm:$0xff] 0
    $region21: #{tpu_custom_call.1} parent=1 // pred_fallthru
      _
    %v61 = vld [vmem:[#allocation2] sm:$0xff]
    %v62 = vld [vmem:[#allocation2 + $0x8] sm:$0xff]
    %v63 = vld [vmem:[#allocation2 + $0x10] sm:$0xff]
    %v64 = vld [vmem:[#allocation2 + $0x18] sm:$0xff]
    %vm65 = vcmp.gt.f32.partialorder %v61, 0.01
    %vm66 = vcmp.gt.f32.partialorder %v62, 0.01
    %vm67 = vcmp.gt.f32.partialorder %v63, 0.01
    %vm68 = vcmp.gt.f32.partialorder %v64, 0.01
    %v69 = vld [vmem:[#allocation5] sm:$0xff]
    %v70 = vld [vmem:[#allocation5 + $0x8] sm:$0xff]
    %v71 = vld [vmem:[#allocation5 + $0x10] sm:$0xff]
    %v72 = vld [vmem:[#allocation5 + $0x18] sm:$0xff]
    %vm73 = vcmp.gt.f32.partialorder %v69, 0.01
    %vm74 = vcmp.gt.f32.partialorder %v70, 0.01
    %vm75 = vcmp.gt.f32.partialorder %v71, 0.01
    %vm76 = vcmp.gt.f32.partialorder %v72, 0.01
    %vm77 = vmxor %vm65, %vm73
    %vm78 = vmxor %vm66, %vm74
    %vm79 = vmxor %vm67, %vm75
    %vm80 = vmxor %vm68, %vm76
    %vm81 = vmxor %vm77, 1
    %vm82 = vmxor %vm78, 1
    %vm83 = vmxor %vm79, 1
    %vm84 = vmxor %vm80, 1
    %v85 = vsel %vm81, 1, 0
    %v86 = vsel %vm82, 1, 0
    %v87 = vsel %vm83, 1, 0
    %v88 = vsel %vm84, 1, 0
    %v89 = vld [vmem:[#allocation7] sm:$0xff]
    %v90 = vadd.s32 %v85, %v86
    %v91 = vadd.s32 %v87, %v88
    %v92 = vadd.s32 %v90, %v91
    %v93 = vadd.s32 %v89, %v92
    %94 = vst [vmem:[#allocation7] sm:$0xff] %v93
    // Predicated region
    $region22: #{tpu_custom_call.1} parent=1 // pred_check
      _
    $region23: #{tpu_custom_call.1} parent=1 // pred_check_branch
      %96 = sbr.rel (0) target = $region25
    $region24: #{tpu_custom_call.1} parent=1 // pred_region
      %98 = vsyncadd [#allocation4], 0
      %s100 = sshll.u32 [#allocation7], 4
      %s101 = int_to_ptr.vmem [resolvable:$true] %s100
      %s102 = sshll.u32 %s2, 4
      %s103 = int_to_ptr.hbm [resolvable:$true] %s102
      %105 = dma.vmem_to_hbm [thread:$0]  %s101, 128, %s103, [#allocation4]
    $region25: #{tpu_custom_call.1} parent=1 // pred_fallthru
      _
    // Predicated region
    $region26: #{tpu_custom_call.1} parent=1 // pred_check
      _
    $region27: #{tpu_custom_call.1} parent=1 // pred_check_branch
      %107 = sbr.rel (0) target = $region29
    $region28: #{tpu_custom_call.1} parent=1 // pred_region
      %109 = dma.done [#allocation4], 128
    $region29: #{tpu_custom_call.1} parent=1 // pred_fallthru
      _
    %110 = vsyncpa [#allocation3], 1
    %111 = vsyncpa [#allocation6], 1
    %112 = vsyncpa [#allocation4], 1

</llo_original>
